<compile_context>
chip_gen: v6e
topology: v6e:2x2x1
jax: 0.10.0
libtpu: 0.0.40
codegen_flags: <defaults>
</compile_context>

<pallas_src>
import functools

import jax
import jax.numpy as jnp
from jax.experimental import pallas as pl
from jax.experimental.pallas import tpu as pltpu


def highway_kernel(x_ref, w_ref, b_ref, o_ref, *, approx_gate: bool):
    """One row tile of the highway layer.

    x_ref : (tm, Hp)    input rows (f32 or bf16)
    w_ref : (Hp, 2*Hp)  fused [Wt^T | Wg^T] weight (matmul dtype)
    b_ref : (1,  2*Hp)  fused [bt | bg] bias (f32)
    o_ref : (tm, Hp)    output rows
    """
    x = x_ref[...]
    # One fused MXU pass for both linears; always accumulate in f32.
    y = jnp.dot(x.astype(w_ref.dtype), w_ref[...],
                preferred_element_type=jnp.float32) + b_ref[...]
    hp = y.shape[-1] // 2                       # static, multiple of 128
    t = jnp.maximum(y[:, :hp], 0.0)             # transform branch (VPU)
    zg = y[:, hp:]
    if approx_gate:
        # sigmoid via EUP exp + EUP approximate reciprocal (frees VALU slots).
        g = pl.reciprocal(1.0 + jnp.exp(-zg), approx=True)
    else:
        g = jax.nn.sigmoid(zg)
    xf = x.astype(jnp.float32)                  # residual mixed in f32
    # Highway mix: x + g*(t - x)  == g*t + (1-g)*x, one fewer multiply.
    o_ref[...] = (xf + g * (t - xf)).astype(o_ref.dtype)


def _round_up(n, m):
    return ((n + m - 1) // m) * m


def _vmem_capacity_bytes():
    """Generation-aware VMEM capacity (64 MiB fallback = v7x-safe)."""
    try:
        info = pltpu.get_tpu_info()
        cap = int(getattr(info, "vmem_capacity_bytes", 0))
        if cap <= 0:
            cap = 64 << 20
    except Exception:
        cap = 64 << 20
    return cap


def _auto_row_tile(m_rows, hp, x_itemsize, out_itemsize, w_itemsize, budget_bytes):
    """Largest row tile (multiple of 8, <=1024) fitting the VMEM budget."""
    # Fused weight + bias.  Budget for 2 pipeline buffers (conservative: the
    # constant index_map means Mosaic won't re-DMA them each step, but may still
    # allocate double buffers).
    fixed = 2 * (hp * 2 * hp * w_itemsize + 2 * hp * 4)
    # Per output row: x tile + out tile, double-buffered.
    per_row = 2 * hp * (x_itemsize + out_itemsize)
    avail = max(budget_bytes - fixed, per_row * 8)
    tm = max(8, min(1024, avail // per_row))
    tm = (tm // 8) * 8
    tm = min(tm, _round_up(max(m_rows, 1), 8))
    return int(tm)


def prepare_highway_params(wt, bt, wg, bg, *, use_bf16_matmul=True):
    """Fuse/pad the two linears once (hoisted out of the per-call path).

    wt/wg: [out=H, in=H] (PyTorch nn.Linear layout); bt/bg: [H].
    Returns (w, b, H): w = (Hp, 2*Hp) packed [Wt^T | Wg^T], b = (1, 2*Hp).
    """
    H = wt.shape[0]
    Hp = _round_up(H, 128)                      # lane-dense hidden dim
    w_dtype = jnp.bfloat16 if use_bf16_matmul else jnp.float32
    w = jnp.zeros((Hp, 2 * Hp), dtype=w_dtype)
    w = w.at[:H, :H].set(wt.T.astype(w_dtype))
    w = w.at[:H, Hp:Hp + H].set(wg.T.astype(w_dtype))
    b = jnp.zeros((1, 2 * Hp), dtype=jnp.float32)
    b = b.at[0, :H].set(bt.astype(jnp.float32))
    b = b.at[0, Hp:Hp + H].set(bg.astype(jnp.float32))
    return w, b, H


def highway_encoder_fused(x, w, b, H, *, tm=None, approx_gate=True):
    """x: [B, S, H]; (w, b, H) from prepare_highway_params (cache & reuse)."""
    B, S, H_in = x.shape
    assert H_in == H, "hidden size mismatch between x and fused params"
    Hp = w.shape[0]
    M = B * S

    out_dtype = x.dtype
    w_itemsize = jnp.dtype(w.dtype).itemsize
    out_itemsize = jnp.dtype(out_dtype).itemsize

    # Activation staging: never pad rows (ragged last tile handled by grid);
    # pad lanes only when H % 128 != 0, and fold the bf16 cast into that pad.
    x2 = x.reshape(M, H)
    if Hp != H:
        if w.dtype == jnp.bfloat16:
            x2 = x2.astype(jnp.bfloat16)        # halve the kernel-side x read
        x2 = jnp.pad(x2, ((0, 0), (0, Hp - H)))
    # else: keep x's dtype in HBM; the kernel casts the MXU operand on the fly.
    x_itemsize = jnp.dtype(x2.dtype).itemsize

    # Generation-aware VMEM sizing.
    cap = _vmem_capacity_bytes()
    budget = min((cap * 3) // 4, 96 << 20)      # tiling budget
    vmem_limit = int(min(cap - (4 << 20), budget + (16 << 20)))

    if tm is None:
        tm = _auto_row_tile(M, Hp, x_itemsize, out_itemsize, w_itemsize, budget)
    tm = max(8, (int(tm) // 8) * 8)
    grid = (pl.cdiv(M, tm),)

    cost = pl.CostEstimate(
        flops=int(2 * M * Hp * (2 * Hp) + 6 * M * Hp),
        transcendentals=int(M * Hp),
        bytes_accessed=int(M * Hp * x_itemsize          # x in
                           + Hp * 2 * Hp * w_itemsize   # fused weights
                           + 2 * Hp * 4                 # fused bias
                           + M * Hp * out_itemsize),    # out
    )

    out = pl.pallas_call(
        functools.partial(highway_kernel, approx_gate=approx_gate),
        out_shape=jax.ShapeDtypeStruct((M, Hp), out_dtype),
        grid_spec=pltpu.PrefetchScalarGridSpec(
            num_scalar_prefetch=0,
            grid=grid,
            in_specs=[
                pl.BlockSpec((tm, Hp), lambda i: (i, 0)),       # x row tile
                pl.BlockSpec((Hp, 2 * Hp), lambda i: (0, 0)),   # fused weights (grid-invariant)
                pl.BlockSpec((1, 2 * Hp), lambda i: (0, 0)),    # fused bias (grid-invariant)
            ],
            out_specs=pl.BlockSpec((tm, Hp), lambda i: (i, 0)),
        ),
        compiler_params=pltpu.CompilerParams(
            dimension_semantics=("parallel",),
            vmem_limit_bytes=vmem_limit,
        ),
        cost_estimate=cost,
    )(x2, w, b)

    if Hp != H:
        out = out[:, :H]
    return out.reshape(B, S, H)


def highway_encoder(x, wt, bt, wg, bg, *, tm=None, use_bf16_matmul=True,
                    approx_gate=True):
    """Convenience one-shot API (fuses params per call; prefer caching
    prepare_highway_params for repeated forwards with static weights)."""
    w, b, H = prepare_highway_params(wt, bt, wg, bg,
                                     use_bf16_matmul=use_bf16_matmul)
    return highway_encoder_fused(x, w, b, H, tm=tm, approx_gate=approx_gate)


def highway_ref(x, wt, bt, wg, bg):
    g = jax.nn.sigmoid(jnp.einsum("bsh,oh->bso", x, wg) + bg)
    t = jax.nn.relu(jnp.einsum("bsh,oh->bso", x, wt) + bt)
    return g * t + (1.0 - g) * x


if __name__ == "__main__":
    B, S, H = 2, 8, 32
    num_layers = 2  # module builds num_layers linears; forward uses only layer 0

    key = jax.random.PRNGKey(0)
    keys = jax.random.split(key, 1 + 4 * num_layers)
    x = jax.random.normal(keys[0], (B, S, H), dtype=jnp.float32)

    # Deterministic PyTorch-Linear-style init (uniform +/- 1/sqrt(H)).
    bound = 1.0 / (H ** 0.5)
    wts, bts, wgs, bgs = [], [], [], []
    for l in range(num_layers):
        k = keys[1 + 4 * l: 1 + 4 * (l + 1)]
        wts.append(jax.random.uniform(k[0], (H, H), minval=-bound, maxval=bound))
        bts.append(jax.random.uniform(k[1], (H,), minval=-bound, maxval=bound))
        wgs.append(jax.random.uniform(k[2], (H, H), minval=-bound, maxval=bound))
        bgs.append(jax.random.uniform(k[3], (H,), minval=-bound, maxval=bound))

    # Forward semantics: only the FIRST (gate, transform) pair is applied
    # because the PyTorch loop returns on its first iteration.
    ref = highway_ref(x, wts[0], bts[0], wgs[0], bgs[0])

    # 1) Exact f32 mode — tight parity check against the reference.
    out_f32 = highway_encoder(x, wts[0], bts[0], wgs[0], bgs[0],
                              use_bf16_matmul=False, approx_gate=False)
    out_f32 = jax.block_until_ready(out_f32)
    assert out_f32.shape == (B, S, H)
    assert jnp.allclose(out_f32, ref, atol=1e-5, rtol=1e-5), "f32 mismatch vs reference"

    # 2) Default perf path — bf16 MXU operands + approx-reciprocal gate, with
    #    fused weights prepared once and reused (hoisted out of per-call path).
    w_fused, b_fused, hdim = prepare_highway_params(wts[0], bts[0], wgs[0], bgs[0])
    out_fast = highway_encoder_fused(x, w_fused, b_fused, hdim)
    out_fast = jax.block_until_ready(out_fast)
    assert out_fast.shape == (B, S, H)
    assert jnp.allclose(out_fast, ref, atol=5e-2, rtol=5e-2), "bf16 path mismatch vs reference"

    print("KERNEL_OK")
</pallas_src>

<mosaic_0001>
module attributes {stable_mosaic.version = 11 : i64} {
  func.func @highway_kernel(%arg0: i32, %arg1: memref<16x128xf32, #tpu.memory_space<vmem>>, %arg2: memref<128x256xf32, #tpu.memory_space<vmem>>, %arg3: memref<1x256xf32, #tpu.memory_space<vmem>>, %arg4: memref<16x128xf32, #tpu.memory_space<vmem>>) attributes {dimension_semantics = [#tpu.dimension_semantics<parallel>], iteration_bounds = array<i64: 1>, scalar_prefetch = 0 : i64, scratch_operands = 0 : i64, tpu.core_type = #tpu.core_type<tc>, window_params = [{transform_indices = @transform_0, window_bounds = array<i64: 16, 128>}, {pipeline_mode = #tpu.pipeline_mode<synchronous>, transform_indices = @transform_1, window_bounds = array<i64: 128, 256>}, {pipeline_mode = #tpu.pipeline_mode<synchronous>, transform_indices = @transform_2, window_bounds = array<i64: 1, 256>}, {transform_indices = @transform_3, window_bounds = array<i64: 16, 128>}]} {
    %c0 = arith.constant 0 : index
    %c0_0 = arith.constant 0 : index
    %0 = vector.load %arg1[%c0, %c0_0] : memref<16x128xf32, #tpu.memory_space<vmem>>, vector<16x128xf32>
    %c0_1 = arith.constant 0 : index
    %c0_2 = arith.constant 0 : index
    %1 = vector.load %arg2[%c0_1, %c0_2] : memref<128x256xf32, #tpu.memory_space<vmem>>, vector<128x256xf32>
    %cst = arith.constant dense<0.000000e+00> : vector<16x256xf32>
    %2 = tpu.matmul %0, %1, %cst {dimension_numbers = #tpu.dot_dimension_numbers<[1], [0], [0], [1], [0, 0, 1, 1], [], []>} : vector<16x128xf32>, vector<128x256xf32>, vector<16x256xf32> -> vector<16x256xf32>
    %c0_3 = arith.constant 0 : index
    %c0_4 = arith.constant 0 : index
    %3 = vector.load %arg3[%c0_3, %c0_4] : memref<1x256xf32, #tpu.memory_space<vmem>>, vector<1x256xf32>
    %4 = vector.broadcast %3 : vector<1x256xf32> to vector<16x256xf32>
    %5 = arith.addf %2, %4 : vector<16x256xf32>
    %6 = vector.extract_strided_slice %5 {offsets = [0, 0], sizes = [16, 128], strides = [1, 1]} : vector<16x256xf32> to vector<16x128xf32>
    %cst_5 = arith.constant 0.000000e+00 : f32
    %7 = vector.broadcast %cst_5 : f32 to vector<16x128xf32>
    %8 = arith.maximumf %6, %7 : vector<16x128xf32>
    %9 = vector.extract_strided_slice %5 {offsets = [0, 128], sizes = [16, 128], strides = [1, 1]} : vector<16x256xf32> to vector<16x128xf32>
    %10 = arith.negf %9 : vector<16x128xf32>
    %11 = math.exp %10 : vector<16x128xf32>
    %cst_6 = arith.constant 1.000000e+00 : f32
    %12 = vector.broadcast %cst_6 : f32 to vector<16x128xf32>
    %13 = arith.addf %12, %11 : vector<16x128xf32>
    %14 = arith.divf %12, %13 : vector<16x128xf32>
    %15 = arith.subf %8, %0 : vector<16x128xf32>
    %16 = arith.mulf %14, %15 : vector<16x128xf32>
    %17 = arith.addf %0, %16 : vector<16x128xf32>
    %c0_7 = arith.constant 0 : index
    %c0_8 = arith.constant 0 : index
    %18 = vector.load %arg4[%c0_7, %c0_8] : memref<16x128xf32, #tpu.memory_space<vmem>>, vector<16x128xf32>
    tpu.vector_store %arg4[%c0_7, %c0_8], %17 {strides = array<i32>} : memref<16x128xf32, #tpu.memory_space<vmem>>, vector<16x128xf32>,
    return
  }
  func.func @transform_0(%arg0: i32) -> (i32, i32) {
    %c0_i32 = arith.constant 0 : i32
    %c0_i32_0 = arith.constant 0 : i32
    return %arg0, %c0_i32 : i32, i32
  }
  func.func @transform_1(%arg0: i32) -> (i32, i32) {
    %c0_i32 = arith.constant 0 : i32
    %c0_i32_0 = arith.constant 0 : i32
    %c0_i32_1 = arith.constant 0 : i32
    return %c0_i32, %c0_i32_0 : i32, i32
  }
  func.func @transform_2(%arg0: i32) -> (i32, i32) {
    %c0_i32 = arith.constant 0 : i32
    %c0_i32_0 = arith.constant 0 : i32
    %c0_i32_1 = arith.constant 0 : i32
    return %c0_i32, %c0_i32_0 : i32, i32
  }
  func.func @transform_3(%arg0: i32) -> (i32, i32) {
    %c0_i32 = arith.constant 0 : i32
    %c0_i32_0 = arith.constant 0 : i32
    return %arg0, %c0_i32 : i32, i32
  }
}

</mosaic_0001>

<llo_original>
// kernel: tpu_custom_call.1
$region0: #{tpu_custom_call.1}
  #allocation0 [shape = 'u32[]', space=smem, size = 0x4, offset = 0x4, fixed_abs, tag = 'smem constant byte address 0x4 - core index']
  #allocation1 [shape = 'u32[144,128]{1,0:T(1,128)}', space=vmem, size = 0x12000, scoped, tag = 'internal scratch']
  %s0 = inlined_call_operand.hbm [shape: f32[16,128], index: 0, kind: input, shape index: {}]
  %s1 = inlined_call_operand.hbm [shape: f32[128,256], index: 1, kind: input, shape index: {}]
  %s2 = inlined_call_operand.vmem [shape: f32[1,256], index: 2, kind: input, shape index: {}]
  %s3 = inlined_call_operand.hbm [shape: f32[16,128], index: 3, kind: output, shape index: {}]
  %s4 = sld [smem:[#allocation0]]
  $region30: #{tpu_custom_call.1} parent=0
    _
  %s6 = ssub.s32 1, %s4
  %s7 = scalar_select 0, %s6, %s4
  $region1: #{tpu_custom_call.1} parent=0
    #allocation2 [shape = 'u8[8192]{0}', space=vmem, size = 0x2000, scoped, tag = 'input window, operand 0, single buffered']
    #allocation3 [shape = 's32[1]{0}', space=sflag, size = 0x4, scoped, tag = 'scoped memory for tpu_custom_call.1']
    #allocation4 [shape = 's32[1]{0}', space=sflag, size = 0x4, scoped, tag = 'scoped memory for tpu_custom_call.1']
    #allocation5 [shape = 'u8[131072]{0}', space=vmem, size = 0x20000, scoped, tag = 'input window, operand 1, single buffered']
    #allocation6 [shape = 's32[1]{0}', space=sflag, size = 0x4, scoped, tag = 'scoped memory for tpu_custom_call.1']
    #allocation7 [shape = 'u8[8192]{0}', space=vmem, size = 0x2000, scoped, tag = 'output window, operand 0, single buffered']
    %8 = vsyncpa [#allocation3], 0
    %9 = vsyncpa [#allocation6], 0
    %10 = vsyncpa [#allocation4], 0
    // Predicated region
    $region2: #{tpu_custom_call.1} parent=1 // pred_check
      _
    $region3: #{tpu_custom_call.1} parent=1 // pred_check_branch
      %12 = sbr.rel (0) target = $region5
    $region4: #{tpu_custom_call.1} parent=1 // pred_region
      %s14 = ssub.s32 256, 256
      %15 = vsyncadd [#allocation3], %s14
      %s16 = sshll.u32 [#allocation2], 4
      %s17 = int_to_ptr.vmem [resolvable:$true] %s16
      %22 = dma.hbm_to_vmem [thread:$0]  %s0, 256, %s17, [#allocation3], 128, 128, 8
    $region5: #{tpu_custom_call.1} parent=1 // pred_fallthru
      _
    // Predicated region
    $region6: #{tpu_custom_call.1} parent=1 // pred_check
      _
    $region7: #{tpu_custom_call.1} parent=1 // pred_check_branch
      %24 = sbr.rel (0) target = $region9
    $region8: #{tpu_custom_call.1} parent=1 // pred_region
      %s26 = ssub.s32 4096, 4096
      %27 = vsyncadd [#allocation6], %s26
      %s28 = sshll.u32 [#allocation5], 4
      %s29 = int_to_ptr.vmem [resolvable:$true] %s28
      %34 = dma.hbm_to_vmem [thread:$0]  %s1, 4096, %s29, [#allocation6], 256, 256, 16
    $region9: #{tpu_custom_call.1} parent=1 // pred_fallthru
      _
    // Predicated region
    $region10: #{tpu_custom_call.1} parent=1 // pred_check
      _
    $region11: #{tpu_custom_call.1} parent=1 // pred_check_branch
      %36 = sbr.rel (0) target = $region13
    $region12: #{tpu_custom_call.1} parent=1 // pred_region
      _
    $region13: #{tpu_custom_call.1} parent=1 // pred_fallthru
      _
    // Predicated region
    $region14: #{tpu_custom_call.1} parent=1 // pred_check
      _
    $region15: #{tpu_custom_call.1} parent=1 // pred_check_branch
      %38 = sbr.rel (0) target = $region17
    $region16: #{tpu_custom_call.1} parent=1 // pred_region
      %39 = dma.done [#allocation3], 256
    $region17: #{tpu_custom_call.1} parent=1 // pred_fallthru
      _
    // Predicated region
    $region18: #{tpu_custom_call.1} parent=1 // pred_check
      _
    $region19: #{tpu_custom_call.1} parent=1 // pred_check_branch
      %41 = sbr.rel (0) target = $region21
    $region20: #{tpu_custom_call.1} parent=1 // pred_region
      %42 = dma.done [#allocation6], 4096
    $region21: #{tpu_custom_call.1} parent=1 // pred_fallthru
      _
    %v43 = vld [vmem:[#allocation2] sm:$0xff]
    %v44 = vld [vmem:[#allocation2 + $0x8] sm:$0xff]
    %v45 = vld [vmem:[#allocation5] sm:$0xff]
    %v46 = vld [vmem:[#allocation5 + $0x8] sm:$0xff]
    %v47 = vld [vmem:[#allocation5 + $0x10] sm:$0xff]
    %v48 = vld [vmem:[#allocation5 + $0x18] sm:$0xff]
    %v49 = vld [vmem:[#allocation5 + $0x20] sm:$0xff]
    %v50 = vld [vmem:[#allocation5 + $0x28] sm:$0xff]
    %v51 = vld [vmem:[#allocation5 + $0x30] sm:$0xff]
    %v52 = vld [vmem:[#allocation5 + $0x38] sm:$0xff]
    %v53 = vld [vmem:[#allocation5 + $0x40] sm:$0xff]
    %v54 = vld [vmem:[#allocation5 + $0x48] sm:$0xff]
    %v55 = vld [vmem:[#allocation5 + $0x50] sm:$0xff]
    %v56 = vld [vmem:[#allocation5 + $0x58] sm:$0xff]
    %v57 = vld [vmem:[#allocation5 + $0x60] sm:$0xff]
    %v58 = vld [vmem:[#allocation5 + $0x68] sm:$0xff]
    %v59 = vld [vmem:[#allocation5 + $0x70] sm:$0xff]
    %v60 = vld [vmem:[#allocation5 + $0x78] sm:$0xff]
    %v61 = vld [vmem:[#allocation5 + $0x80] sm:$0xff]
    %v62 = vld [vmem:[#allocation5 + $0x88] sm:$0xff]
    %v63 = vld [vmem:[#allocation5 + $0x90] sm:$0xff]
    %v64 = vld [vmem:[#allocation5 + $0x98] sm:$0xff]
    %v65 = vld [vmem:[#allocation5 + $0xa0] sm:$0xff]
    %v66 = vld [vmem:[#allocation5 + $0xa8] sm:$0xff]
    %v67 = vld [vmem:[#allocation5 + $0xb0] sm:$0xff]
    %v68 = vld [vmem:[#allocation5 + $0xb8] sm:$0xff]
    %v69 = vld [vmem:[#allocation5 + $0xc0] sm:$0xff]
    %v70 = vld [vmem:[#allocation5 + $0xc8] sm:$0xff]
    %v71 = vld [vmem:[#allocation5 + $0xd0] sm:$0xff]
    %v72 = vld [vmem:[#allocation5 + $0xd8] sm:$0xff]
    %v73 = vld [vmem:[#allocation5 + $0xe0] sm:$0xff]
    %v74 = vld [vmem:[#allocation5 + $0xe8] sm:$0xff]
    %v75 = vld [vmem:[#allocation5 + $0xf0] sm:$0xff]
    %v76 = vld [vmem:[#allocation5 + $0xf8] sm:$0xff]
    %v77 = vld [vmem:[%s2] sm:$0x3]
    %v79 = vlaneseq
    %v80 = vshrl.u32 %v79, 7
    %v81 = vsub.s32 0, %v80
    %v82 = vrot.slane %v77, %v81
    %v83 = vlaneseq
    %v84 = vshrl.u32 %v83, 7
    %v85 = vsub.s32 1, %v84
    %v86 = vrot.slane %v77, %v85
    %89 = vmatprep.subr.mxu0 %v76
    %90 = vmatpush1.msra.mxu0 %v75
    %91 = vmatprep.subr.mxu0 %v74
    %92 = vmatpush1.msra.mxu0 %v73
    %93 = vmatprep.subr.mxu0 %v72
    %94 = vmatpush1.msra.mxu0 %v71
    %95 = vmatprep.subr.mxu0 %v70
    %96 = vmatpush1.msra.mxu0 %v69
    %97 = vmatprep.subr.mxu0 %v68
    %98 = vmatpush1.msra.mxu0 %v67
    %99 = vmatprep.subr.mxu0 %v66
    %100 = vmatpush1.msra.mxu0 %v65
    %101 = vmatprep.subr.mxu0 %v64
    %102 = vmatpush1.msra.mxu0 %v63
    %103 = vmatprep.subr.mxu0 %v62
    %104 = vmatpush1.msra.mxu0 %v61
    %105 = vmatprep.subr.mxu0 %v60
    %106 = vmatpush1.msra.mxu0 %v59
    %107 = vmatprep.subr.mxu0 %v58
    %108 = vmatpush1.msra.mxu0 %v57
    %109 = vmatprep.subr.mxu0 %v56
    %110 = vmatpush1.msra.mxu0 %v55
    %111 = vmatprep.subr.mxu0 %v54
    %112 = vmatpush1.msra.mxu0 %v53
    %113 = vmatprep.subr.mxu0 %v52
    %114 = vmatpush1.msra.mxu0 %v51
    %115 = vmatprep.subr.mxu0 %v50
    %116 = vmatpush1.msra.mxu0 %v49
    %117 = vmatprep.subr.mxu0 %v48
    %118 = vmatpush1.msra.mxu0 %v47
    %119 = vmatprep.subr.mxu0 %v46
    %120 = vmatpush1.msra.mxu0 %v45
    %121 = vmatprep.subr.mxu0 0.0
    %122 = vmatpush2.msra.mxu0 0.0
    %123 = vmatprep.subr.mxu0 0.0
    %124 = vmatpush2.msra.mxu0 0.0
    %125 = vmatprep.subr.mxu0 0.0
    %126 = vmatpush2.msra.mxu0 0.0
    %127 = vmatprep.subr.mxu0 0.0
    %128 = vmatpush2.msra.mxu0 0.0
    %129 = vmatprep.subr.mxu0 0.0
    %130 = vmatpush2.msra.mxu0 0.0
    %131 = vmatprep.subr.mxu0 0.0
    %132 = vmatpush2.msra.mxu0 0.0
    %133 = vmatprep.subr.mxu0 0.0
    %134 = vmatpush2.msra.mxu0 0.0
    %135 = vmatprep.subr.mxu0 0.0
    %136 = vmatpush2.msra.mxu0 0.0
    %137 = vmatprep.subr.mxu0 0.0
    %138 = vmatpush2.msra.mxu0 0.0
    %139 = vmatprep.subr.mxu0 0.0
    %140 = vmatpush2.msra.mxu0 0.0
    %141 = vmatprep.subr.mxu0 0.0
    %142 = vmatpush2.msra.mxu0 0.0
    %143 = vmatprep.subr.mxu0 0.0
    %144 = vmatpush2.msra.mxu0 0.0
    %145 = vmatprep.subr.mxu0 0.0
    %146 = vmatpush2.msra.mxu0 0.0
    %147 = vmatprep.subr.mxu0 0.0
    %148 = vmatpush2.msra.mxu0 0.0
    %149 = vmatprep.subr.mxu0 0.0
    %150 = vmatpush2.msra.mxu0 0.0
    %151 = vmatprep.subr.mxu0 0.0
    %152 = vmatpush2.msra.mxu0 0.0
    %153 = vmatprep.mubr.f32.mxu0 0.0
    %154 = vmatmul.mubr.f32.gmra.mxu0 %v43
    %v155 = vpop.f32.mrf.mxu0
    %v156 = vadd.f32 %v82, %v155
    %v157 = vpop.f32.mrf.mxu0
    %v158 = vadd.f32 %v86, %v157
    %159 = vmatprep.mubr.f32.mxu0 0.0
    %160 = vmatmul.mubr.f32.gmra.mxu0 %v44
    %v161 = vpop.f32.mrf.mxu0
    %v162 = vadd.f32 %v82, %v161
    %v163 = vpop.f32.mrf.mxu0
    %v164 = vadd.f32 %v86, %v163
    %165 = vdwg.mxu0
    %v166 = vmax.f32 %v156, 0.0
    %v167 = vmax.f32 %v162, 0.0
    %v168 = vxor.u32 %v158, 2147483648
    %v169 = vxor.u32 %v164, 2147483648
    %v170 = vmul.f32 %v168, 1.442695
    %v171 = vpow.pop %v170
    %v172 = vmul.f32 %v169, 1.442695
    %v173 = vpow.pop %v172
    %v174 = vadd.f32 %v171, 1.0
    %v175 = vadd.f32 %v173, 1.0
    %v176 = vrcp.pop %v174
    %v177 = vmul.f32 1.0, %v176
    %v178 = vrcp.pop %v175
    %v179 = vmul.f32 1.0, %v178
    %v180 = vsub.f32 %v166, %v43
    %v181 = vsub.f32 %v167, %v44
    %v182 = vmul.f32 %v177, %v180
    %v183 = vmul.f32 %v179, %v181
    %v184 = vadd.f32 %v43, %v182
    %v185 = vadd.f32 %v44, %v183
    %186 = vst [vmem:[#allocation7] sm:$0xff] %v184
    %187 = vst [vmem:[#allocation7 + $0x8] sm:$0xff] %v185
    // Predicated region
    $region22: #{tpu_custom_call.1} parent=1 // pred_check
      _
    $region23: #{tpu_custom_call.1} parent=1 // pred_check_branch
      %189 = sbr.rel (0) target = $region25
    $region24: #{tpu_custom_call.1} parent=1 // pred_region
      %s191 = ssub.s32 256, 256
      %192 = vsyncadd [#allocation4], %s191
      %s193 = sshll.u32 [#allocation7], 4
      %s194 = int_to_ptr.vmem [resolvable:$true] %s193
      %199 = dma.vmem_to_hbm [thread:$0]  %s194, 256, %s3, [#allocation4], 128, 128, 8
    $region25: #{tpu_custom_call.1} parent=1 // pred_fallthru
      _
    // Predicated region
    $region26: #{tpu_custom_call.1} parent=1 // pred_check
      _
    $region27: #{tpu_custom_call.1} parent=1 // pred_check_branch
      %201 = sbr.rel (0) target = $region29
    $region28: #{tpu_custom_call.1} parent=1 // pred_region
      %202 = dma.done [#allocation4], 256
    $region29: #{tpu_custom_call.1} parent=1 // pred_fallthru
      _
    %203 = vsyncpa [#allocation3], 1
    %204 = vsyncpa [#allocation6], 1
    %205 = vsyncpa [#allocation4], 1

</llo_original>
